<compile_context>
chip_gen: v7x
topology: tpu7x:2x2x1
jax: 0.10.0
libtpu: 0.0.40
codegen_flags: <defaults>
</compile_context>

<pallas_src>
import functools
import math

import jax
import jax.numpy as jnp
from jax.experimental import pallas as pl
from jax.experimental.pallas import tpu as pltpu


# ----------------------------------------------------------------------------
# Kernel: one (TR, C) row-tile per grid step.
#   mu   = mean(x, -1)
#   var  = max(mean(x*x, -1) - mu^2, 0)       (biased variance, matches unbiased=False)
#   out  = x * rsqrt(var + eps) * weight
# Padded tail rows (ragged grid) produce garbage that is masked on store.
# ----------------------------------------------------------------------------
def _biasfree_layernorm_kernel(x_ref, w_ref, o_ref, *, eps):
    x = x_ref[...].astype(jnp.float32)                   # (TR, C)
    mu = jnp.mean(x, axis=-1, keepdims=True)             # (TR, 1)  XLU reduce
    ex2 = jnp.mean(x * x, axis=-1, keepdims=True)        # (TR, 1)  XLU reduce
    var = jnp.maximum(ex2 - mu * mu, 0.0)                # guard cancellation
    inv = jax.lax.rsqrt(var + eps)                       # EUP
    w = w_ref[...].astype(jnp.float32)                   # (1, C) broadcast over rows
    o_ref[...] = (x * inv * w).astype(o_ref.dtype)


def _pick_row_tile(rows, feat, itemsize):
    """Row-block size: ~2 MiB per x block, a multiple of the dtype's minimum
    sublane tile, and small enough that the grid has >=2 steps whenever the
    row count allows it (megacore sharding + software pipelining)."""
    min_rt = 16 if itemsize < 4 else 8        # (16,128) bf16 tile / (8,128) f32 tile
    if rows <= min_rt:
        return rows                           # full-extent block (always legal)
    budget = 2 * 1024 * 1024                  # bytes per x block; safe on v5e..v7x
    tr = max(min_rt, (budget // max(1, feat * itemsize)) // min_rt * min_rt)
    # keep >=2 grid steps so the second TensorCore isn't idle on small inputs
    half = -(-rows // 2)                      # cdiv(rows, 2)
    half = -(-half // min_rt) * min_rt        # round up to sublane multiple
    return min(tr, half)


def biasfree_layernorm(x, weight, *, eps=1e-5):
    """x: (..., C) float array; weight: (C,). Normalizes over the last dim."""
    orig_shape = x.shape
    C = orig_shape[-1]
    rows = math.prod(orig_shape[:-1]) if len(orig_shape) > 1 else 1

    x2 = x.reshape(rows, C)
    w2 = weight.reshape(1, C).astype(x.dtype)

    itemsize = jnp.dtype(x.dtype).itemsize
    tr = _pick_row_tile(rows, C, itemsize)
    grid = (pl.cdiv(rows, tr),)               # ragged tail is masked by Pallas

    kernel = functools.partial(_biasfree_layernorm_kernel, eps=eps)
    out = pl.pallas_call(
        kernel,
        out_shape=jax.ShapeDtypeStruct((rows, C), x.dtype),
        grid_spec=pltpu.PrefetchScalarGridSpec(
            num_scalar_prefetch=0,
            grid=grid,
            in_specs=[
                pl.BlockSpec((tr, C), lambda i: (i, 0)),   # row tile of x
                pl.BlockSpec((1, C), lambda i: (0, 0)),    # weight, resident (no re-DMA)
            ],
            out_specs=pl.BlockSpec((tr, C), lambda i: (i, 0)),
        ),
        compiler_params=pltpu.CompilerParams(
            dimension_semantics=("parallel",),             # shard rows across TCs
        ),
    )(x2, w2)
    return out.reshape(orig_shape)


# ----------------------------------------------------------------------------
# Pure-JAX reference (same math as PyTorch BiasFree_LayerNorm).
# ----------------------------------------------------------------------------
def _reference(x, weight, eps=1e-5):
    var = jnp.var(x, axis=-1, keepdims=True)               # biased (ddof=0)
    return x / jnp.sqrt(var + eps) * weight


if __name__ == "__main__":
    key = jax.random.PRNGKey(0)
    kx, kw, kx2 = jax.random.split(key, 3)

    # Restormer-style usage: tokens = flattened 16x16 spatial grid, C=48 channels.
    B, L, C = 2, 16 * 16, 48
    x = jax.random.normal(kx, (B, L, C), jnp.float32)
    # PyTorch initializes weight to ones; use a random weight to exercise the scale path.
    weight = 1.0 + 0.1 * jax.random.normal(kw, (C,), jnp.float32)

    out = jax.block_until_ready(biasfree_layernorm(x, weight))
    ref = _reference(x, weight)
    assert out.shape == x.shape
    assert jnp.allclose(out, ref, atol=1e-4, rtol=1e-4)

    # Ragged row count (exercises cdiv grid + masked tail block) in bf16 end-to-end.
    x_bf = jax.random.normal(kx2, (3, 37, C), jnp.float32).astype(jnp.bfloat16)
    w_bf = weight.astype(jnp.bfloat16)
    out_bf = jax.block_until_ready(biasfree_layernorm(x_bf, w_bf))
    ref_bf = _reference(x_bf.astype(jnp.float32), w_bf.astype(jnp.float32))
    assert out_bf.dtype == jnp.bfloat16
    assert out_bf.shape == x_bf.shape
    assert jnp.allclose(out_bf.astype(jnp.float32), ref_bf, atol=2e-2, rtol=2e-2)

    print("KERNEL_OK")
</pallas_src>

<mosaic_0001>
module attributes {stable_mosaic.version = 11 : i64} {
  func.func @_biasfree_layernorm_kernel(%arg0: i32, %arg1: memref<256x48xf32, #tpu.memory_space<vmem>>, %arg2: memref<1x48xf32, #tpu.memory_space<vmem>>, %arg3: memref<256x48xf32, #tpu.memory_space<vmem>>) attributes {dimension_semantics = [#tpu.dimension_semantics<parallel>], iteration_bounds = array<i64: 2>, scalar_prefetch = 0 : i64, scratch_operands = 0 : i64, tpu.core_type = #tpu.core_type<tc>, window_params = [{transform_indices = @transform_0, window_bounds = array<i64: 256, 48>}, {pipeline_mode = #tpu.pipeline_mode<synchronous>, transform_indices = @transform_1, window_bounds = array<i64: 1, 48>}, {transform_indices = @transform_2, window_bounds = array<i64: 256, 48>}]} {
    %c0 = arith.constant 0 : index
    %c0_0 = arith.constant 0 : index
    %0 = vector.load %arg1[%c0, %c0_0] : memref<256x48xf32, #tpu.memory_space<vmem>>, vector<256x48xf32>
    %cst = arith.constant dense<0.000000e+00> : vector<256xf32>
    %1 = vector.multi_reduction <add>, %0, %cst [1] : vector<256x48xf32> to vector<256xf32>
    %2 = vector.shape_cast %1 : vector<256xf32> to vector<256x1xf32>
    %cst_1 = arith.constant 4.800000e+01 : f32
    %3 = vector.broadcast %cst_1 : f32 to vector<256x1xf32>
    %4 = arith.divf %2, %3 : vector<256x1xf32>
    %5 = arith.mulf %0, %0 : vector<256x48xf32>
    %cst_2 = arith.constant dense<0.000000e+00> : vector<256xf32>
    %6 = vector.multi_reduction <add>, %5, %cst_2 [1] : vector<256x48xf32> to vector<256xf32>
    %7 = vector.shape_cast %6 : vector<256xf32> to vector<256x1xf32>
    %cst_3 = arith.constant 4.800000e+01 : f32
    %8 = vector.broadcast %cst_3 : f32 to vector<256x1xf32>
    %9 = arith.divf %7, %8 : vector<256x1xf32>
    %10 = arith.mulf %4, %4 : vector<256x1xf32>
    %11 = arith.subf %9, %10 : vector<256x1xf32>
    %cst_4 = arith.constant 0.000000e+00 : f32
    %12 = vector.broadcast %cst_4 : f32 to vector<256x1xf32>
    %13 = arith.maximumf %11, %12 : vector<256x1xf32>
    %cst_5 = arith.constant 9.99999974E-6 : f32
    %14 = vector.broadcast %cst_5 : f32 to vector<256x1xf32>
    %15 = arith.addf %13, %14 : vector<256x1xf32>
    %16 = math.rsqrt %15 : vector<256x1xf32>
    %c0_6 = arith.constant 0 : index
    %c0_7 = arith.constant 0 : index
    %17 = vector.load %arg2[%c0_6, %c0_7] : memref<1x48xf32, #tpu.memory_space<vmem>>, vector<1x48xf32>
    %18 = vector.broadcast %16 : vector<256x1xf32> to vector<256x48xf32>
    %19 = arith.mulf %0, %18 : vector<256x48xf32>
    %20 = vector.broadcast %17 : vector<1x48xf32> to vector<256x48xf32>
    %21 = arith.mulf %19, %20 : vector<256x48xf32>
    %c0_8 = arith.constant 0 : index
    %c0_9 = arith.constant 0 : index
    %22 = vector.load %arg3[%c0_8, %c0_9] : memref<256x48xf32, #tpu.memory_space<vmem>>, vector<256x48xf32>
    tpu.vector_store %arg3[%c0_8, %c0_9], %21 {strides = array<i32>} : memref<256x48xf32, #tpu.memory_space<vmem>>, vector<256x48xf32>,
    return
  }
  func.func @transform_0(%arg0: i32) -> (i32, i32) {
    %c0_i32 = arith.constant 0 : i32
    %c0_i32_0 = arith.constant 0 : i32
    return %arg0, %c0_i32 : i32, i32
  }
  func.func @transform_1(%arg0: i32) -> (i32, i32) {
    %c0_i32 = arith.constant 0 : i32
    %c0_i32_0 = arith.constant 0 : i32
    %c0_i32_1 = arith.constant 0 : i32
    return %c0_i32, %c0_i32_0 : i32, i32
  }
  func.func @transform_2(%arg0: i32) -> (i32, i32) {
    %c0_i32 = arith.constant 0 : i32
    %c0_i32_0 = arith.constant 0 : i32
    return %arg0, %c0_i32 : i32, i32
  }
}

</mosaic_0001>

<llo_original>
// kernel: tpu_custom_call.1
$region0: #{tpu_custom_call.1}
  #allocation0 [shape = 'u32[]', space=smem, size = 0x4, offset = 0x4, fixed_abs, tag = 'smem constant byte address 0x4 - core index']
  #allocation1 [shape = 'u32[144,128]{1,0:T(1,128)}', space=vmem, size = 0x12000, scoped, tag = 'internal scratch']
  %s0 = inlined_call_operand.vmem [shape: f32[512,48], index: 0, kind: input, shape index: {}]
  %s1 = inlined_call_operand.vmem [shape: f32[1,48], index: 1, kind: input, shape index: {}]
  %s2 = inlined_call_operand.vmem [shape: f32[512,48], index: 2, kind: output, shape index: {}]
  %s3 = sld [smem:[#allocation0]]
  $region41: #{tpu_custom_call.1} parent=0
    _
  %s5 = ssub.s32 1, %s3
  %s6 = scalar_select 0, %s5, %s3
  loop: start=0, step=1, limit=4
  $region2: #{tpu_custom_call.1} parent=0 // loop_pre_header
    _
  $region3: #{tpu_custom_call.1} parent=0 // loop_header
    %s8 = sphi 0, %s12
    %p9 = scmp.ge.s32.totalorder %s8, 4
    %s18 = sphi 0, %s20
    %s21 = sphi 0, %s18
    %s22 = sphi 0, %s21
    %s38 = sphi 0, %s22
    %s42 = sphi 0, %s42
    %s44 = sphi 0, %s42
    %s45 = sphi 0, %s44
    %s59 = sphi 0, %s45
    %s65 = sphi 0, %s67
    %s68 = sphi 0, %s65
    %s69 = sphi 0, %s68
    %s85 = sphi 0, %s69
  $region4: #{tpu_custom_call.1} parent=0 // loop_header_branch
    %11 = sbr.rel (%p9) target = $region8
  $region5: #{tpu_custom_call.1} parent=0 // loop_body
    %s13 = ssub.s32 %s8, 1
    %s14 = ssub.s32 %s8, 2
    %s15 = sadd.s32 %s8, 1
    %s16 = ssub.s32 %s8, %s15
    %p17 = scmp.eq.s32.totalorder %s16, 0
    %s19 = sadd.s32 %s18, 1
    %s20 = scalar_select %p17, %s18, %s19
    %p23 = pneg %p17
    %p24 = scmp.eq.s32.totalorder %s8, 1
    %p25 = por %p23, %p24
    %p26 = scmp.ne.s32.totalorder %s18, %s21
    %p27 = scmp.eq.s32.totalorder %s8, 0
    %p28 = por %p26, %p27
    %p29 = scmp.ne.s32.totalorder %s18, %s21
    %p30 = scmp.eq.s32.totalorder %s13, 1
    %p31 = por %p29, %p30
    %p32 = scmp.ne.s32.totalorder %s21, %s22
    %p33 = scmp.eq.s32.totalorder %s13, 0
    %p34 = por %p32, %p33
    %p35 = scmp.ne.s32.totalorder %s21, %s22
    %p36 = scmp.eq.s32.totalorder %s14, 1
    %p37 = por %p35, %p36
    %p39 = scmp.ne.s32.totalorder %s22, %s38
    %p40 = scmp.eq.s32.totalorder %s14, 0
    %p41 = por %p39, %p40
    %s43 = sadd.s32 %s42, 1
    %p46 = scmp.eq.s32.totalorder %s8, 1
    %p47 = scmp.ne.s32.totalorder %s42, %s44
    %p48 = scmp.eq.s32.totalorder %s8, 0
    %p49 = por %p47, %p48
    %p50 = scmp.ne.s32.totalorder %s42, %s44
    %p51 = scmp.eq.s32.totalorder %s13, 1
    %p52 = por %p50, %p51
    %p53 = scmp.ne.s32.totalorder %s44, %s45
    %p54 = scmp.eq.s32.totalorder %s13, 0
    %p55 = por %p53, %p54
    %p56 = scmp.ne.s32.totalorder %s44, %s45
    %p57 = scmp.eq.s32.totalorder %s14, 1
    %p58 = por %p56, %p57
    %p60 = scmp.ne.s32.totalorder %s45, %s59
    %p61 = scmp.eq.s32.totalorder %s14, 0
    %p62 = por %p60, %p61
    %s63 = ssub.s32 %s8, %s15
    %p64 = scmp.eq.s32.totalorder %s63, 0
    %s66 = sadd.s32 %s65, 1
    %s67 = scalar_select %p64, %s65, %s66
    %p70 = pneg %p64
    %p71 = scmp.eq.s32.totalorder %s8, 1
    %p72 = por %p70, %p71
    %p73 = scmp.ne.s32.totalorder %s65, %s68
    %p74 = scmp.eq.s32.totalorder %s8, 0
    %p75 = por %p73, %p74
    %p76 = scmp.ne.s32.totalorder %s65, %s68
    %p77 = scmp.eq.s32.totalorder %s13, 1
    %p78 = por %p76, %p77
    %p79 = scmp.ne.s32.totalorder %s68, %s69
    %p80 = scmp.eq.s32.totalorder %s13, 0
    %p81 = por %p79, %p80
    %p82 = scmp.ne.s32.totalorder %s68, %s69
    %p83 = scmp.eq.s32.totalorder %s14, 1
    %p84 = por %p82, %p83
    %p86 = scmp.ne.s32.totalorder %s69, %s85
    %p87 = scmp.eq.s32.totalorder %s14, 0
    %p88 = por %p86, %p87
    %p89 = scmp.le.s32.totalorder 1, %s8
    %p90 = scmp.lt.s32.totalorder %s8, 3
    %p91 = pnand %p89, %p90
    %p92 = pneg %p91
    // Predicated region
    $region9: #{tpu_custom_call.1} parent=5 // pred_check
      _
    $region10: #{tpu_custom_call.1} parent=5 // pred_check_branch
      %94 = sbr.rel (%p91) target = $region12
    $region11: #{tpu_custom_call.1} parent=5 // pred_region
      %s95 = ssub.s32 %s8, 1
      // Predicated region
      $region13: #{tpu_custom_call.1} parent=11 // pred_check
        %p96 = pneg %p55
      $region14: #{tpu_custom_call.1} parent=11 // pred_check_branch
        %98 = sbr.rel (%p96) target = $region16
      $region15: #{tpu_custom_call.1} parent=11 // pred_region
        _
      $region16: #{tpu_custom_call.1} parent=11 // pred_fallthru
        _
    $region12: #{tpu_custom_call.1} parent=5 // pred_fallthru
      _
    %p99 = scmp.lt.s32.totalorder %s8, 2
    // Predicated region
    $region17: #{tpu_custom_call.1} parent=5 // pred_check
      %p100 = pneg %p99
    $region18: #{tpu_custom_call.1} parent=5 // pred_check_branch
      %102 = sbr.rel (%p100) target = $region20
    $region19: #{tpu_custom_call.1} parent=5 // pred_region
      // Predicated region
      $region21: #{tpu_custom_call.1} parent=19 // pred_check
        %p103 = pneg %p28
      $region22: #{tpu_custom_call.1} parent=19 // pred_check_branch
        %105 = sbr.rel (%p103) target = $region24
      $region23: #{tpu_custom_call.1} parent=19 // pred_region
        %s106 = smul.u32 32, %s8
        %p107 = scmp.lt.s32.totalorder %s106, 63
        %s108 = scalar_select %p107, %s106, 63
        %s109 = smul.addr %s108, 8
        %s110 = scalar_lea.vmem %s0, %s109
        %s111 = smul.u32 32, %s8
      $region24: #{tpu_custom_call.1} parent=19 // pred_fallthru
        _
    $region20: #{tpu_custom_call.1} parent=5 // pred_fallthru
      _
    %p112 = scmp.le.s32.totalorder 1, %s8
    %p113 = scmp.lt.s32.totalorder %s8, 3
    %p114 = pnand %p112, %p113
    %p115 = pneg %p114
    // Predicated region
    $region25: #{tpu_custom_call.1} parent=5 // pred_check
      _
    $region26: #{tpu_custom_call.1} parent=5 // pred_check_branch
      %117 = sbr.rel (%p114) target = $region28
    $region27: #{tpu_custom_call.1} parent=5 // pred_region
      %s118 = ssub.s32 %s8, 1
      %s119 = smul.u32 32, %s13
      %p120 = scmp.lt.s32.totalorder %s119, 63
      %s121 = scalar_select %p120, %s119, 63
      %s122 = smul.addr %s121, 8
      %s123 = scalar_lea.vmem %s0, %s122
      %p124 = pneg %p34
      %p125 = pneg %p31
      %p126 = pneg %p55
      %p127 = pneg %p52
      %p128 = pneg %p81
      %p129 = pneg %p78
      %s130 = smul.u32 32, %s13
      %p131 = scmp.lt.s32.totalorder %s130, 63
      %s132 = scalar_select %p131, %s130, 63
      %s133 = smul.addr %s132, 8
      %s134 = scalar_lea.vmem %s2, %s133
      %s135 = smul.u32 32, %s13
      %p136 = scmp.lt.s32.totalorder %s135, 63
      %s137 = scalar_select %p136, %s135, 63
      %s138 = smul.addr %s137, 8
      %s139 = scalar_lea.vmem %s0, %s138
      %s140 = smul.u32 32, %s13
      %s141 = smul.u32 32, %s13
      %p142 = scmp.lt.s32.totalorder %s141, 63
      %s143 = scalar_select %p142, %s141, 63
      %s144 = smul.addr %s143, 8
      %s145 = scalar_lea.vmem %s2, %s144
      %s146 = smul.u32 32, %s13
      %v147 = vld [vmem:[%s139] sm:$0xff]
      %v148 = vld [vmem:[%s139 + $0x8] sm:$0xff]
      %v149 = vld [vmem:[%s139 + $0x10] sm:$0xff]
      %v150 = vld [vmem:[%s139 + $0x18] sm:$0xff]
      %v151 = vld [vmem:[%s139 + $0x20] sm:$0xff]
      %v152 = vld [vmem:[%s139 + $0x28] sm:$0xff]
      %v153 = vld [vmem:[%s139 + $0x30] sm:$0xff]
      %v154 = vld [vmem:[%s139 + $0x38] sm:$0xff]
      %v155 = vld [vmem:[%s139 + $0x40] sm:$0xff]
      %v156 = vld [vmem:[%s139 + $0x48] sm:$0xff]
      %v157 = vld [vmem:[%s139 + $0x50] sm:$0xff]
      %v158 = vld [vmem:[%s139 + $0x58] sm:$0xff]
      %v159 = vld [vmem:[%s139 + $0x60] sm:$0xff]
      %v160 = vld [vmem:[%s139 + $0x68] sm:$0xff]
      %v161 = vld [vmem:[%s139 + $0x70] sm:$0xff]
      %v162 = vld [vmem:[%s139 + $0x78] sm:$0xff]
      %v163 = vld [vmem:[%s139 + $0x80] sm:$0xff]
      %v164 = vld [vmem:[%s139 + $0x88] sm:$0xff]
      %v165 = vld [vmem:[%s139 + $0x90] sm:$0xff]
      %v166 = vld [vmem:[%s139 + $0x98] sm:$0xff]
      %v167 = vld [vmem:[%s139 + $0xa0] sm:$0xff]
      %v168 = vld [vmem:[%s139 + $0xa8] sm:$0xff]
      %v169 = vld [vmem:[%s139 + $0xb0] sm:$0xff]
      %v170 = vld [vmem:[%s139 + $0xb8] sm:$0xff]
      %v171 = vld [vmem:[%s139 + $0xc0] sm:$0xff]
      %v172 = vld [vmem:[%s139 + $0xc8] sm:$0xff]
      %v173 = vld [vmem:[%s139 + $0xd0] sm:$0xff]
      %v174 = vld [vmem:[%s139 + $0xd8] sm:$0xff]
      %v175 = vld [vmem:[%s139 + $0xe0] sm:$0xff]
      %v176 = vld [vmem:[%s139 + $0xe8] sm:$0xff]
      %v177 = vld [vmem:[%s139 + $0xf0] sm:$0xff]
      %v178 = vld [vmem:[%s139 + $0xf8] sm:$0xff]
      %vm179 = vcmask 392192
      %v180 = vsel %vm179, %v147, 0.0
      %181 = vadd.xlane.f32.xlu0 %v180
      %v182 = vpop.xlane.xlu0 %181
      %v183 = vsel %vm179, %v148, 0.0
      %184 = vadd.xlane.f32.xlu0 %v183
      %v185 = vpop.xlane.xlu0 %184
      %v186 = vsel %vm179, %v149, 0.0
      %187 = vadd.xlane.f32.xlu0 %v186
      %v188 = vpop.xlane.xlu0 %187
      %v189 = vsel %vm179, %v150, 0.0
      %190 = vadd.xlane.f32.xlu0 %v189
      %v191 = vpop.xlane.xlu0 %190
      %v192 = vsel %vm179, %v151, 0.0
      %193 = vadd.xlane.f32.xlu0 %v192
      %v194 = vpop.xlane.xlu0 %193
      %v195 = vsel %vm179, %v152, 0.0
      %196 = vadd.xlane.f32.xlu0 %v195
      %v197 = vpop.xlane.xlu0 %196
      %v198 = vsel %vm179, %v153, 0.0
      %199 = vadd.xlane.f32.xlu0 %v198
      %v200 = vpop.xlane.xlu0 %199
      %v201 = vsel %vm179, %v154, 0.0
      %202 = vadd.xlane.f32.xlu0 %v201
      %v203 = vpop.xlane.xlu0 %202
      %v204 = vsel %vm179, %v155, 0.0
      %205 = vadd.xlane.f32.xlu0 %v204
      %v206 = vpop.xlane.xlu0 %205
      %v207 = vsel %vm179, %v156, 0.0
      %208 = vadd.xlane.f32.xlu0 %v207
      %v209 = vpop.xlane.xlu0 %208
      %v210 = vsel %vm179, %v157, 0.0
      %211 = vadd.xlane.f32.xlu0 %v210
      %v212 = vpop.xlane.xlu0 %211
      %v213 = vsel %vm179, %v158, 0.0
      %214 = vadd.xlane.f32.xlu0 %v213
      %v215 = vpop.xlane.xlu0 %214
      %v216 = vsel %vm179, %v159, 0.0
      %217 = vadd.xlane.f32.xlu0 %v216
      %v218 = vpop.xlane.xlu0 %217
      %v219 = vsel %vm179, %v160, 0.0
      %220 = vadd.xlane.f32.xlu0 %v219
      %v221 = vpop.xlane.xlu0 %220
      %v222 = vsel %vm179, %v161, 0.0
      %223 = vadd.xlane.f32.xlu0 %v222
      %v224 = vpop.xlane.xlu0 %223
      %v225 = vsel %vm179, %v162, 0.0
      %226 = vadd.xlane.f32.xlu0 %v225
      %v227 = vpop.xlane.xlu0 %226
      %v228 = vsel %vm179, %v163, 0.0
      %229 = vadd.xlane.f32.xlu0 %v228
      %v230 = vpop.xlane.xlu0 %229
      %v231 = vsel %vm179, %v164, 0.0
      %232 = vadd.xlane.f32.xlu0 %v231
      %v233 = vpop.xlane.xlu0 %232
      %v234 = vsel %vm179, %v165, 0.0
      %235 = vadd.xlane.f32.xlu0 %v234
      %v236 = vpop.xlane.xlu0 %235
      %v237 = vsel %vm179, %v166, 0.0
      %238 = vadd.xlane.f32.xlu0 %v237
      %v239 = vpop.xlane.xlu0 %238
      %v240 = vsel %vm179, %v167, 0.0
      %241 = vadd.xlane.f32.xlu0 %v240
      %v242 = vpop.xlane.xlu0 %241
      %v243 = vsel %vm179, %v168, 0.0
      %244 = vadd.xlane.f32.xlu0 %v243
      %v245 = vpop.xlane.xlu0 %244
      %v246 = vsel %vm179, %v169, 0.0
      %247 = vadd.xlane.f32.xlu0 %v246
      %v248 = vpop.xlane.xlu0 %247
      %v249 = vsel %vm179, %v170, 0.0
      %250 = vadd.xlane.f32.xlu0 %v249
      %v251 = vpop.xlane.xlu0 %250
      %v252 = vsel %vm179, %v171, 0.0
      %253 = vadd.xlane.f32.xlu0 %v252
      %v254 = vpop.xlane.xlu0 %253
      %v255 = vsel %vm179, %v172, 0.0
      %256 = vadd.xlane.f32.xlu0 %v255
      %v257 = vpop.xlane.xlu0 %256
      %v258 = vsel %vm179, %v173, 0.0
      %259 = vadd.xlane.f32.xlu0 %v258
      %v260 = vpop.xlane.xlu0 %259
      %v261 = vsel %vm179, %v174, 0.0
      %262 = vadd.xlane.f32.xlu0 %v261
      %v263 = vpop.xlane.xlu0 %262
      %v264 = vsel %vm179, %v175, 0.0
      %265 = vadd.xlane.f32.xlu0 %v264
      %v266 = vpop.xlane.xlu0 %265
      %v267 = vsel %vm179, %v176, 0.0
      %268 = vadd.xlane.f32.xlu0 %v267
      %v269 = vpop.xlane.xlu0 %268
      %v270 = vsel %vm179, %v177, 0.0
      %271 = vadd.xlane.f32.xlu0 %v270
      %v272 = vpop.xlane.xlu0 %271
      %v273 = vsel %vm179, %v178, 0.0
      %274 = vadd.xlane.f32.xlu0 %v273
      %v275 = vpop.xlane.xlu0 %274
      %v276 = vrcp.pop 48.0
      %v277 = vmul.f32 %v182, %v276
      %v278 = vmul.f32 %v185, %v276
      %v279 = vmul.f32 %v188, %v276
      %v280 = vmul.f32 %v191, %v276
      %v281 = vmul.f32 %v194, %v276
      %v282 = vmul.f32 %v197, %v276
      %v283 = vmul.f32 %v200, %v276
      %v284 = vmul.f32 %v203, %v276
      %v285 = vmul.f32 %v206, %v276
      %v286 = vmul.f32 %v209, %v276
      %v287 = vmul.f32 %v212, %v276
      %v288 = vmul.f32 %v215, %v276
      %v289 = vmul.f32 %v218, %v276
      %v290 = vmul.f32 %v221, %v276
      %v291 = vmul.f32 %v224, %v276
      %v292 = vmul.f32 %v227, %v276
      %v293 = vmul.f32 %v230, %v276
      %v294 = vmul.f32 %v233, %v276
      %v295 = vmul.f32 %v236, %v276
      %v296 = vmul.f32 %v239, %v276
      %v297 = vmul.f32 %v242, %v276
      %v298 = vmul.f32 %v245, %v276
      %v299 = vmul.f32 %v248, %v276
      %v300 = vmul.f32 %v251, %v276
      %v301 = vmul.f32 %v254, %v276
      %v302 = vmul.f32 %v257, %v276
      %v303 = vmul.f32 %v260, %v276
      %v304 = vmul.f32 %v263, %v276
      %v305 = vmul.f32 %v266, %v276
      %v306 = vmul.f32 %v269, %v276
      %v307 = vmul.f32 %v272, %v276
      %v308 = vmul.f32 %v275, %v276
      %v309 = vmul.f32 %v147, %v147
      %v310 = vmul.f32 %v148, %v148
      %v311 = vmul.f32 %v149, %v149
      %v312 = vmul.f32 %v150, %v150
      %v313 = vmul.f32 %v151, %v151
      %v314 = vmul.f32 %v152, %v152
      %v315 = vmul.f32 %v153, %v153
      %v316 = vmul.f32 %v154, %v154
      %v317 = vmul.f32 %v155, %v155
      %v318 = vmul.f32 %v156, %v156
      %v319 = vmul.f32 %v157, %v157
      %v320 = vmul.f32 %v158, %v158
      %v321 = vmul.f32 %v159, %v159
      %v322 = vmul.f32 %v160, %v160
      %v323 = vmul.f32 %v161, %v161
      %v324 = vmul.f32 %v162, %v162
      %v325 = vmul.f32 %v163, %v163
      %v326 = vmul.f32 %v164, %v164
      %v327 = vmul.f32 %v165, %v165
      %v328 = vmul.f32 %v166, %v166
      %v329 = vmul.f32 %v167, %v167
      %v330 = vmul.f32 %v168, %v168
      %v331 = vmul.f32 %v169, %v169
      %v332 = vmul.f32 %v170, %v170
      %v333 = vmul.f32 %v171, %v171
      %v334 = vmul.f32 %v172, %v172
      %v335 = vmul.f32 %v173, %v173
      %v336 = vmul.f32 %v174, %v174
      %v337 = vmul.f32 %v175, %v175
      %v338 = vmul.f32 %v176, %v176
      %v339 = vmul.f32 %v177, %v177
      %v340 = vmul.f32 %v178, %v178
      %v341 = vsel %vm179, %v309, 0.0
      %342 = vadd.xlane.f32.xlu0 %v341
      %v343 = vpop.xlane.xlu0 %342
      %v344 = vsel %vm179, %v310, 0.0
      %345 = vadd.xlane.f32.xlu0 %v344
      %v346 = vpop.xlane.xlu0 %345
      %v347 = vsel %vm179, %v311, 0.0
      %348 = vadd.xlane.f32.xlu0 %v347
      %v349 = vpop.xlane.xlu0 %348
      %v350 = vsel %vm179, %v312, 0.0
      %351 = vadd.xlane.f32.xlu0 %v350
      %v352 = vpop.xlane.xlu0 %351
      %v353 = vsel %vm179, %v313, 0.0
      %354 = vadd.xlane.f32.xlu0 %v353
      %v355 = vpop.xlane.xlu0 %354
      %v356 = vsel %vm179, %v314, 0.0
      %357 = vadd.xlane.f32.xlu0 %v356
      %v358 = vpop.xlane.xlu0 %357
      %v359 = vsel %vm179, %v315, 0.0
      %360 = vadd.xlane.f32.xlu0 %v359
      %v361 = vpop.xlane.xlu0 %360
      %v362 = vsel %vm179, %v316, 0.0
      %363 = vadd.xlane.f32.xlu0 %v362
      %v364 = vpop.xlane.xlu0 %363
      %v365 = vsel %vm179, %v317, 0.0
      %366 = vadd.xlane.f32.xlu0 %v365
      %v367 = vpop.xlane.xlu0 %366
      %v368 = vsel %vm179, %v318, 0.0
      %369 = vadd.xlane.f32.xlu0 %v368
      %v370 = vpop.xlane.xlu0 %369
      %v371 = vsel %vm179, %v319, 0.0
      %372 = vadd.xlane.f32.xlu0 %v371
      %v373 = vpop.xlane.xlu0 %372
      %v374 = vsel %vm179, %v320, 0.0
      %375 = vadd.xlane.f32.xlu0 %v374
      %v376 = vpop.xlane.xlu0 %375
      %v377 = vsel %vm179, %v321, 0.0
      %378 = vadd.xlane.f32.xlu0 %v377
      %v379 = vpop.xlane.xlu0 %378
      %v380 = vsel %vm179, %v322, 0.0
      %381 = vadd.xlane.f32.xlu0 %v380
      %v382 = vpop.xlane.xlu0 %381
      %v383 = vsel %vm179, %v323, 0.0
      %384 = vadd.xlane.f32.xlu0 %v383
      %v385 = vpop.xlane.xlu0 %384
      %v386 = vsel %vm179, %v324, 0.0
      %387 = vadd.xlane.f32.xlu0 %v386
      %v388 = vpop.xlane.xlu0 %387
      %v389 = vsel %vm179, %v325, 0.0
      %390 = vadd.xlane.f32.xlu0 %v389
      %v391 = vpop.xlane.xlu0 %390
      %v392 = vsel %vm179, %v326, 0.0
      %393 = vadd.xlane.f32.xlu0 %v392
      %v394 = vpop.xlane.xlu0 %393
      %v395 = vsel %vm179, %v327, 0.0
      %396 = vadd.xlane.f32.xlu0 %v395
      %v397 = vpop.xlane.xlu0 %396
      %v398 = vsel %vm179, %v328, 0.0
      %399 = vadd.xlane.f32.xlu0 %v398
      %v400 = vpop.xlane.xlu0 %399
      %v401 = vsel %vm179, %v329, 0.0
      %402 = vadd.xlane.f32.xlu0 %v401
      %v403 = vpop.xlane.xlu0 %402
      %v404 = vsel %vm179, %v330, 0.0
      %405 = vadd.xlane.f32.xlu0 %v404
      %v406 = vpop.xlane.xlu0 %405
      %v407 = vsel %vm179, %v331, 0.0
      %408 = vadd.xlane.f32.xlu0 %v407
      %v409 = vpop.xlane.xlu0 %408
      %v410 = vsel %vm179, %v332, 0.0
      %411 = vadd.xlane.f32.xlu0 %v410
      %v412 = vpop.xlane.xlu0 %411
      %v413 = vsel %vm179, %v333, 0.0
      %414 = vadd.xlane.f32.xlu0 %v413
      %v415 = vpop.xlane.xlu0 %414
      %v416 = vsel %vm179, %v334, 0.0
      %417 = vadd.xlane.f32.xlu0 %v416
      %v418 = vpop.xlane.xlu0 %417
      %v419 = vsel %vm179, %v335, 0.0
      %420 = vadd.xlane.f32.xlu0 %v419
      %v421 = vpop.xlane.xlu0 %420
      %v422 = vsel %vm179, %v336, 0.0
      %423 = vadd.xlane.f32.xlu0 %v422
      %v424 = vpop.xlane.xlu0 %423
      %v425 = vsel %vm179, %v337, 0.0
      %426 = vadd.xlane.f32.xlu0 %v425
      %v427 = vpop.xlane.xlu0 %426
      %v428 = vsel %vm179, %v338, 0.0
      %429 = vadd.xlane.f32.xlu0 %v428
      %v430 = vpop.xlane.xlu0 %429
      %v431 = vsel %vm179, %v339, 0.0
      %432 = vadd.xlane.f32.xlu0 %v431
      %v433 = vpop.xlane.xlu0 %432
      %v434 = vsel %vm179, %v340, 0.0
      %435 = vadd.xlane.f32.xlu0 %v434
      %v436 = vpop.xlane.xlu0 %435
      %v437 = vmul.f32 %v343, %v276
      %v438 = vmul.f32 %v346, %v276
      %v439 = vmul.f32 %v349, %v276
      %v440 = vmul.f32 %v352, %v276
      %v441 = vmul.f32 %v355, %v276
      %v442 = vmul.f32 %v358, %v276
      %v443 = vmul.f32 %v361, %v276
      %v444 = vmul.f32 %v364, %v276
      %v445 = vmul.f32 %v367, %v276
      %v446 = vmul.f32 %v370, %v276
      %v447 = vmul.f32 %v373, %v276
      %v448 = vmul.f32 %v376, %v276
      %v449 = vmul.f32 %v379, %v276
      %v450 = vmul.f32 %v382, %v276
      %v451 = vmul.f32 %v385, %v276
      %v452 = vmul.f32 %v388, %v276
      %v453 = vmul.f32 %v391, %v276
      %v454 = vmul.f32 %v394, %v276
      %v455 = vmul.f32 %v397, %v276
      %v456 = vmul.f32 %v400, %v276
      %v457 = vmul.f32 %v403, %v276
      %v458 = vmul.f32 %v406, %v276
      %v459 = vmul.f32 %v409, %v276
      %v460 = vmul.f32 %v412, %v276
      %v461 = vmul.f32 %v415, %v276
      %v462 = vmul.f32 %v418, %v276
      %v463 = vmul.f32 %v421, %v276
      %v464 = vmul.f32 %v424, %v276
      %v465 = vmul.f32 %v427, %v276
      %v466 = vmul.f32 %v430, %v276
      %v467 = vmul.f32 %v433, %v276
      %v468 = vmul.f32 %v436, %v276
      %v469 = vmul.f32 %v277, %v277
      %v470 = vmul.f32 %v278, %v278
      %v471 = vmul.f32 %v279, %v279
      %v472 = vmul.f32 %v280, %v280
      %v473 = vmul.f32 %v281, %v281
      %v474 = vmul.f32 %v282, %v282
      %v475 = vmul.f32 %v283, %v283
      %v476 = vmul.f32 %v284, %v284
      %v477 = vmul.f32 %v285, %v285
      %v478 = vmul.f32 %v286, %v286
      %v479 = vmul.f32 %v287, %v287
      %v480 = vmul.f32 %v288, %v288
      %v481 = vmul.f32 %v289, %v289
      %v482 = vmul.f32 %v290, %v290
      %v483 = vmul.f32 %v291, %v291
      %v484 = vmul.f32 %v292, %v292
      %v485 = vmul.f32 %v293, %v293
      %v486 = vmul.f32 %v294, %v294
      %v487 = vmul.f32 %v295, %v295
      %v488 = vmul.f32 %v296, %v296
      %v489 = vmul.f32 %v297, %v297
      %v490 = vmul.f32 %v298, %v298
      %v491 = vmul.f32 %v299, %v299
      %v492 = vmul.f32 %v300, %v300
      %v493 = vmul.f32 %v301, %v301
      %v494 = vmul.f32 %v302, %v302
      %v495 = vmul.f32 %v303, %v303
      %v496 = vmul.f32 %v304, %v304
      %v497 = vmul.f32 %v305, %v305
      %v498 = vmul.f32 %v306, %v306
      %v499 = vmul.f32 %v307, %v307
      %v500 = vmul.f32 %v308, %v308
      %v501 = vsub.f32 %v437, %v469
      %v502 = vsub.f32 %v438, %v470
      %v503 = vsub.f32 %v439, %v471
      %v504 = vsub.f32 %v440, %v472
      %v505 = vsub.f32 %v441, %v473
      %v506 = vsub.f32 %v442, %v474
      %v507 = vsub.f32 %v443, %v475
      %v508 = vsub.f32 %v444, %v476
      %v509 = vsub.f32 %v445, %v477
      %v510 = vsub.f32 %v446, %v478
      %v511 = vsub.f32 %v447, %v479
      %v512 = vsub.f32 %v448, %v480
      %v513 = vsub.f32 %v449, %v481
      %v514 = vsub.f32 %v450, %v482
      %v515 = vsub.f32 %v451, %v483
      %v516 = vsub.f32 %v452, %v484
      %v517 = vsub.f32 %v453, %v485
      %v518 = vsub.f32 %v454, %v486
      %v519 = vsub.f32 %v455, %v487
      %v520 = vsub.f32 %v456, %v488
      %v521 = vsub.f32 %v457, %v489
      %v522 = vsub.f32 %v458, %v490
      %v523 = vsub.f32 %v459, %v491
      %v524 = vsub.f32 %v460, %v492
      %v525 = vsub.f32 %v461, %v493
      %v526 = vsub.f32 %v462, %v494
      %v527 = vsub.f32 %v463, %v495
      %v528 = vsub.f32 %v464, %v496
      %v529 = vsub.f32 %v465, %v497
      %v530 = vsub.f32 %v466, %v498
      %v531 = vsub.f32 %v467, %v499
      %v532 = vsub.f32 %v468, %v500
      %v533 = vmax.f32 %v501, 0.0
      %v534 = vmax.f32 %v502, 0.0
      %v535 = vmax.f32 %v503, 0.0
      %v536 = vmax.f32 %v504, 0.0
      %v537 = vmax.f32 %v505, 0.0
      %v538 = vmax.f32 %v506, 0.0
      %v539 = vmax.f32 %v507, 0.0
      %v540 = vmax.f32 %v508, 0.0
      %v541 = vmax.f32 %v509, 0.0
      %v542 = vmax.f32 %v510, 0.0
      %v543 = vmax.f32 %v511, 0.0
      %v544 = vmax.f32 %v512, 0.0
      %v545 = vmax.f32 %v513, 0.0
      %v546 = vmax.f32 %v514, 0.0
      %v547 = vmax.f32 %v515, 0.0
      %v548 = vmax.f32 %v516, 0.0
      %v549 = vmax.f32 %v517, 0.0
      %v550 = vmax.f32 %v518, 0.0
      %v551 = vmax.f32 %v519, 0.0
      %v552 = vmax.f32 %v520, 0.0
      %v553 = vmax.f32 %v521, 0.0
      %v554 = vmax.f32 %v522, 0.0
      %v555 = vmax.f32 %v523, 0.0
      %v556 = vmax.f32 %v524, 0.0
      %v557 = vmax.f32 %v525, 0.0
      %v558 = vmax.f32 %v526, 0.0
      %v559 = vmax.f32 %v527, 0.0
      %v560 = vmax.f32 %v528, 0.0
      %v561 = vmax.f32 %v529, 0.0
      %v562 = vmax.f32 %v530, 0.0
      %v563 = vmax.f32 %v531, 0.0
      %v564 = vmax.f32 %v532, 0.0
      %v565 = vadd.f32 %v533, 1e-05
      %v566 = vadd.f32 %v534, 1e-05
      %v567 = vadd.f32 %v535, 1e-05
      %v568 = vadd.f32 %v536, 1e-05
      %v569 = vadd.f32 %v537, 1e-05
      %v570 = vadd.f32 %v538, 1e-05
      %v571 = vadd.f32 %v539, 1e-05
      %v572 = vadd.f32 %v540, 1e-05
      %v573 = vadd.f32 %v541, 1e-05
      %v574 = vadd.f32 %v542, 1e-05
      %v575 = vadd.f32 %v543, 1e-05
      %v576 = vadd.f32 %v544, 1e-05
      %v577 = vadd.f32 %v545, 1e-05
      %v578 = vadd.f32 %v546, 1e-05
      %v579 = vadd.f32 %v547, 1e-05
      %v580 = vadd.f32 %v548, 1e-05
      %v581 = vadd.f32 %v549, 1e-05
      %v582 = vadd.f32 %v550, 1e-05
      %v583 = vadd.f32 %v551, 1e-05
      %v584 = vadd.f32 %v552, 1e-05
      %v585 = vadd.f32 %v553, 1e-05
      %v586 = vadd.f32 %v554, 1e-05
      %v587 = vadd.f32 %v555, 1e-05
      %v588 = vadd.f32 %v556, 1e-05
      %v589 = vadd.f32 %v557, 1e-05
      %v590 = vadd.f32 %v558, 1e-05
      %v591 = vadd.f32 %v559, 1e-05
      %v592 = vadd.f32 %v560, 1e-05
      %v593 = vadd.f32 %v561, 1e-05
      %v594 = vadd.f32 %v562, 1e-05
      %v595 = vadd.f32 %v563, 1e-05
      %v596 = vadd.f32 %v564, 1e-05
      %v597 = vrsqrt.pop %v565
      %v598 = vrsqrt.pop %v566
      %v599 = vrsqrt.pop %v567
      %v600 = vrsqrt.pop %v568
      %v601 = vrsqrt.pop %v569
      %v602 = vrsqrt.pop %v570
      %v603 = vrsqrt.pop %v571
      %v604 = vrsqrt.pop %v572
      %v605 = vrsqrt.pop %v573
      %v606 = vrsqrt.pop %v574
      %v607 = vrsqrt.pop %v575
      %v608 = vrsqrt.pop %v576
      %v609 = vrsqrt.pop %v577
      %v610 = vrsqrt.pop %v578
      %v611 = vrsqrt.pop %v579
      %v612 = vrsqrt.pop %v580
      %v613 = vrsqrt.pop %v581
      %v614 = vrsqrt.pop %v582
      %v615 = vrsqrt.pop %v583
      %v616 = vrsqrt.pop %v584
      %v617 = vrsqrt.pop %v585
      %v618 = vrsqrt.pop %v586
      %v619 = vrsqrt.pop %v587
      %v620 = vrsqrt.pop %v588
      %v621 = vrsqrt.pop %v589
      %v622 = vrsqrt.pop %v590
      %v623 = vrsqrt.pop %v591
      %v624 = vrsqrt.pop %v592
      %v625 = vrsqrt.pop %v593
      %v626 = vrsqrt.pop %v594
      %v627 = vrsqrt.pop %v595
      %v628 = vrsqrt.pop %v596
      %v629 = vld [vmem:[%s1] sm:$0x1]
      %v630 = vmul.f32 %v147, %v597
      %v631 = vmul.f32 %v148, %v598
      %v632 = vmul.f32 %v149, %v599
      %v633 = vmul.f32 %v150, %v600
      %v634 = vmul.f32 %v151, %v601
      %v635 = vmul.f32 %v152, %v602
      %v636 = vmul.f32 %v153, %v603
      %v637 = vmul.f32 %v154, %v604
      %v638 = vmul.f32 %v155, %v605
      %v639 = vmul.f32 %v156, %v606
      %v640 = vmul.f32 %v157, %v607
      %v641 = vmul.f32 %v158, %v608
      %v642 = vmul.f32 %v159, %v609
      %v643 = vmul.f32 %v160, %v610
      %v644 = vmul.f32 %v161, %v611
      %v645 = vmul.f32 %v162, %v612
      %v646 = vmul.f32 %v163, %v613
      %v647 = vmul.f32 %v164, %v614
      %v648 = vmul.f32 %v165, %v615
      %v649 = vmul.f32 %v166, %v616
      %v650 = vmul.f32 %v167, %v617
      %v651 = vmul.f32 %v168, %v618
      %v652 = vmul.f32 %v169, %v619
      %v653 = vmul.f32 %v170, %v620
      %v654 = vmul.f32 %v171, %v621
      %v655 = vmul.f32 %v172, %v622
      %v656 = vmul.f32 %v173, %v623
      %v657 = vmul.f32 %v174, %v624
      %v658 = vmul.f32 %v175, %v625
      %v659 = vmul.f32 %v176, %v626
      %v660 = vmul.f32 %v177, %v627
      %v661 = vmul.f32 %v178, %v628
      %v663 = vlaneseq
      %v664 = vshrl.u32 %v663, 7
      %v665 = vsub.s32 0, %v664
      %v666 = vrot.slane %v629, %v665
      %v668 = vmul.f32 %v630, %v666
      %v669 = vmul.f32 %v631, %v666
      %v670 = vmul.f32 %v632, %v666
      %v671 = vmul.f32 %v633, %v666
      %v672 = vmul.f32 %v634, %v666
      %v673 = vmul.f32 %v635, %v666
      %v674 = vmul.f32 %v636, %v666
      %v675 = vmul.f32 %v637, %v666
      %v676 = vmul.f32 %v638, %v666
      %v677 = vmul.f32 %v639, %v666
      %v678 = vmul.f32 %v640, %v666
      %v679 = vmul.f32 %v641, %v666
      %v680 = vmul.f32 %v642, %v666
      %v681 = vmul.f32 %v643, %v666
      %v682 = vmul.f32 %v644, %v666
      %v683 = vmul.f32 %v645, %v666
      %v684 = vmul.f32 %v646, %v666
      %v685 = vmul.f32 %v647, %v666
      %v686 = vmul.f32 %v648, %v666
      %v687 = vmul.f32 %v649, %v666
      %v688 = vmul.f32 %v650, %v666
      %v689 = vmul.f32 %v651, %v666
      %v690 = vmul.f32 %v652, %v666
      %v691 = vmul.f32 %v653, %v666
      %v692 = vmul.f32 %v654, %v666
      %v693 = vmul.f32 %v655, %v666
      %v694 = vmul.f32 %v656, %v666
      %v695 = vmul.f32 %v657, %v666
      %v696 = vmul.f32 %v658, %v666
      %v697 = vmul.f32 %v659, %v666
      %v698 = vmul.f32 %v660, %v666
      %v699 = vmul.f32 %v661, %v666
      %700 = vst.msk [vmem:[%s145] sm:$0xff] %vm179, %v668
      %701 = vst.msk [vmem:[%s145 + $0x8] sm:$0xff] %vm179, %v669
      %702 = vst.msk [vmem:[%s145 + $0x10] sm:$0xff] %vm179, %v670
      %703 = vst.msk [vmem:[%s145 + $0x18] sm:$0xff] %vm179, %v671
      %704 = vst.msk [vmem:[%s145 + $0x20] sm:$0xff] %vm179, %v672
      %705 = vst.msk [vmem:[%s145 + $0x28] sm:$0xff] %vm179, %v673
      %706 = vst.msk [vmem:[%s145 + $0x30] sm:$0xff] %vm179, %v674
      %707 = vst.msk [vmem:[%s145 + $0x38] sm:$0xff] %vm179, %v675
      %708 = vst.msk [vmem:[%s145 + $0x40] sm:$0xff] %vm179, %v676
      %709 = vst.msk [vmem:[%s145 + $0x48] sm:$0xff] %vm179, %v677
      %710 = vst.msk [vmem:[%s145 + $0x50] sm:$0xff] %vm179, %v678
      %711 = vst.msk [vmem:[%s145 + $0x58] sm:$0xff] %vm179, %v679
      %712 = vst.msk [vmem:[%s145 + $0x60] sm:$0xff] %vm179, %v680
      %713 = vst.msk [vmem:[%s145 + $0x68] sm:$0xff] %vm179, %v681
      %714 = vst.msk [vmem:[%s145 + $0x70] sm:$0xff] %vm179, %v682
      %715 = vst.msk [vmem:[%s145 + $0x78] sm:$0xff] %vm179, %v683
      %716 = vst.msk [vmem:[%s145 + $0x80] sm:$0xff] %vm179, %v684
      %717 = vst.msk [vmem:[%s145 + $0x88] sm:$0xff] %vm179, %v685
      %718 = vst.msk [vmem:[%s145 + $0x90] sm:$0xff] %vm179, %v686
      %719 = vst.msk [vmem:[%s145 + $0x98] sm:$0xff] %vm179, %v687
      %720 = vst.msk [vmem:[%s145 + $0xa0] sm:$0xff] %vm179, %v688
      %721 = vst.msk [vmem:[%s145 + $0xa8] sm:$0xff] %vm179, %v689
      %722 = vst.msk [vmem:[%s145 + $0xb0] sm:$0xff] %vm179, %v690
      %723 = vst.msk [vmem:[%s145 + $0xb8] sm:$0xff] %vm179, %v691
      %724 = vst.msk [vmem:[%s145 + $0xc0] sm:$0xff] %vm179, %v692
      %725 = vst.msk [vmem:[%s145 + $0xc8] sm:$0xff] %vm179, %v693
      %726 = vst.msk [vmem:[%s145 + $0xd0] sm:$0xff] %vm179, %v694
      %727 = vst.msk [vmem:[%s145 + $0xd8] sm:$0xff] %vm179, %v695
      %728 = vst.msk [vmem:[%s145 + $0xe0] sm:$0xff] %vm179, %v696
      %729 = vst.msk [vmem:[%s145 + $0xe8] sm:$0xff] %vm179, %v697
      %730 = vst.msk [vmem:[%s145 + $0xf0] sm:$0xff] %vm179, %v698
      %731 = vst.msk [vmem:[%s145 + $0xf8] sm:$0xff] %vm179, %v699
      %s732 = smul.u32 32, %s13
      %p733 = scmp.lt.s32.totalorder %s732, 63
      %s734 = scalar_select %p733, %s732, 63
      %s735 = smul.addr %s734, 8
      %s736 = scalar_lea.vmem %s2, %s735
      // Predicated region
      $region29: #{tpu_custom_call.1} parent=27 // pred_check
        %p737 = pneg %p78
      $region30: #{tpu_custom_call.1} parent=27 // pred_check_branch
        %739 = sbr.rel (%p737) target = $region32
      $region31: #{tpu_custom_call.1} parent=27 // pred_region
        %s740 = smul.u32 32, %s13
      $region32: #{tpu_custom_call.1} parent=27 // pred_fallthru
        _
    $region28: #{tpu_custom_call.1} parent=5 // pred_fallthru
      _
    %p741 = scmp.le.s32.totalorder 2, %s8
    // Predicated region
    $region33: #{tpu_custom_call.1} parent=5 // pred_check
      %p742 = pneg %p741
    $region34: #{tpu_custom_call.1} parent=5 // pred_check_branch
      %744 = sbr.rel (%p742) target = $region36
    $region35: #{tpu_custom_call.1} parent=5 // pred_region
      %s745 = ssub.s32 %s8, 2
      // Predicated region
      $region37: #{tpu_custom_call.1} parent=35 // pred_check
        %p746 = pneg %p84
      $region38: #{tpu_custom_call.1} parent=35 // pred_check_branch
        %748 = sbr.rel (%p746) target = $region40
      $region39: #{tpu_custom_call.1} parent=35 // pred_region
        %s749 = smul.u32 32, %s14
        %p750 = scmp.lt.s32.totalorder %s749, 63
        %s751 = scalar_select %p750, %s749, 63
        %s752 = smul.addr %s751, 8
        %s753 = scalar_lea.vmem %s2, %s752
      $region40: #{tpu_custom_call.1} parent=35 // pred_fallthru
        _
    $region36: #{tpu_custom_call.1} parent=5 // pred_fallthru
      _
  $region6: #{tpu_custom_call.1} parent=0 // loop_footer
    %s12 = sadd.s32 1, %s8
  $region7: #{tpu_custom_call.1} parent=0 // loop_footer_branch
    %7 = sbr.rel target = $region3
  $region8: #{tpu_custom_call.1} parent=0 // loop_exit
    _

</llo_original>
